<compile_context>
chip_gen: v7x
topology: tpu7x:2x2x1
jax: 0.10.0
libtpu: 0.0.40
codegen_flags: <defaults>
</compile_context>

<pallas_src>
import math
import jax
import jax.numpy as jnp
from jax.experimental import pallas as pl
from jax.experimental.pallas import tpu as pltpu


def emlp_kernel(x_ref, w1_ref, b1_ref, w2_ref, b2_ref, out_ref):
    # x_ref : [Bt, D]    w1_ref: [D, Hp]    b1_ref: [1, Hp]
    # w2_ref: [1, Hp]    b2_ref: SMEM (1,) scalar    out_ref: [1, Bt]
    #
    # fc1 -> dropout (identity in eval) -> relu
    # TODO(synk): dropout1 (p=0.25) training-mode stochastic masking is not
    #             reproduced; eval-mode identity is implemented.
    h1 = jnp.dot(x_ref[...], w1_ref[...],
                 preferred_element_type=jnp.float32)
    h1 = jnp.maximum(h1 + b1_ref[...], 0.0)                     # (Bt, Hp)

    # fc2 (out_features == 1): contract Hp with the transposed activations so
    # the result is a lane-dense (1, Bt) row (same transposed-RHS matmul
    # pattern as the reference attention kernels).  b2 is a scalar from SMEM.
    logits = jnp.dot(w2_ref[...], h1.T,
                     preferred_element_type=jnp.float32)        # (1, Bt)
    logits = logits + b2_ref[0]
    out_ref[...] = jax.nn.sigmoid(logits).astype(out_ref.dtype)


def _round_up(n, m):
    return ((n + m - 1) // m) * m


def _pick_tile_b(B, tile_b_max):
    """Batch-tile size: multiple of 128, >=2 grid steps for large B, capped."""
    tile_b_max = max(128, _round_up(int(tile_b_max), 128))
    if B <= 256:
        return _round_up(max(B, 1), 128)
    half = _round_up(-(-B // 2), 128)        # ceil(B/2) rounded to 128
    return int(min(tile_b_max, half))


def emlp_forward(x, w1, b1, w2, b2, *, tile_b_max=2048):
    """x: [B, D] f32; w1: [D, H]; b1: [H]; w2: [H, 1]; b2: [1] -> [B, 1] f32."""
    B, D = x.shape
    H = w1.shape[1]

    # Pad hidden dim to a multiple of 128 with exact zeros (bit-identical).
    Hp = _round_up(H, 128)
    w1p = jnp.pad(w1, ((0, 0), (0, Hp - H)))
    b1p = jnp.pad(b1, (0, Hp - H)).reshape(1, Hp)
    w2row = jnp.pad(w2.reshape(1, H), ((0, 0), (0, Hp - H)))
    b2s = b2.reshape(1).astype(jnp.float32)

    # Grid over the batch: cdiv + zero row-padding (padded rows are computed
    # but sliced off; rows are independent so valid rows are unaffected).
    tile_b = _pick_tile_b(B, tile_b_max)
    grid_b = int(pl.cdiv(B, tile_b))
    Bp = grid_b * tile_b
    xp = jnp.pad(x, ((0, Bp - B), (0, 0))) if Bp != B else x

    cp_kwargs = dict(dimension_semantics=("parallel",))
    if tile_b > 2048:
        # Opt-in larger tiles (v6e/v7x) may exceed the default scoped VMEM.
        cp_kwargs["vmem_limit_bytes"] = 48 * 1024 * 1024

    out_row = pl.pallas_call(
        emlp_kernel,
        out_shape=jax.ShapeDtypeStruct((1, Bp), jnp.float32),
        grid=(grid_b,),
        in_specs=[
            # x: batch-tiled, double-buffered.
            pl.BlockSpec((tile_b, D), lambda i: (i, 0)),
            # Weights: constant index_map -> DMA'd once, resident across grid.
            pl.BlockSpec((D, Hp), lambda i: (0, 0)),
            pl.BlockSpec((1, Hp), lambda i: (0, 0)),
            pl.BlockSpec((1, Hp), lambda i: (0, 0)),
            # b2: scalar in SMEM.
            pl.BlockSpec(memory_space=pltpu.MemorySpace.SMEM),
        ],
        # Lane-dense output row: last dim is a multiple of 128.
        out_specs=pl.BlockSpec((1, tile_b), lambda i: (0, i)),
        compiler_params=pltpu.CompilerParams(**cp_kwargs),
    )(xp, w1p, b1p, w2row, b2s)

    # Layout plumbing back to the PyTorch-shaped (B, 1) output.
    return out_row[0, :B].reshape(B, 1)


def make_params(key, input_dimension):
    """Deterministic parameter init mimicking nn.Linear's uniform fan-in init."""
    hidden_units = int(max(30, round(input_dimension / 30)) * 10)
    out_units = 1
    k1, k2, k3, k4 = jax.random.split(key, 4)

    bound1 = 1.0 / math.sqrt(input_dimension)
    # stored transposed relative to PyTorch: [in, out]
    w1 = jax.random.uniform(k1, (input_dimension, hidden_units),
                            minval=-bound1, maxval=bound1, dtype=jnp.float32)
    b1 = jax.random.uniform(k2, (hidden_units,),
                            minval=-bound1, maxval=bound1, dtype=jnp.float32)

    bound2 = 1.0 / math.sqrt(hidden_units)
    w2 = jax.random.uniform(k3, (hidden_units, out_units),
                            minval=-bound2, maxval=bound2, dtype=jnp.float32)
    b2 = jax.random.uniform(k4, (out_units,),
                            minval=-bound2, maxval=bound2, dtype=jnp.float32)
    return w1, b1, w2, b2


def reference_forward(x, w1, b1, w2, b2):
    h1 = jnp.maximum(x @ w1 + b1, 0.0)
    return jax.nn.sigmoid(h1 @ w2 + b2)


if __name__ == "__main__":
    key = jax.random.PRNGKey(0)
    k_p, k_x = jax.random.split(key, 2)

    input_dimension = 32  # -> hidden_units = 300 (padded to 384 inside wrapper)
    w1, b1, w2, b2 = make_params(k_p, input_dimension)

    # Small / ragged / tiled batches: exercise single-step, cdiv+pad, and the
    # two-parallel-step (megacore) paths.
    for batch in (8, 300, 512):
        kx = jax.random.fold_in(k_x, batch)
        x = jax.random.normal(kx, (batch, input_dimension), dtype=jnp.float32)
        out = jax.block_until_ready(emlp_forward(x, w1, b1, w2, b2))
        ref = reference_forward(x, w1, b1, w2, b2)
        assert out.shape == (batch, 1), (batch, out.shape)
        assert jnp.allclose(out, ref, atol=1e-4, rtol=1e-4), batch

    print("KERNEL_OK")
</pallas_src>

<mosaic_0001>
module attributes {stable_mosaic.version = 11 : i64} {
  func.func @emlp_kernel(%arg0: i32, %arg1: memref<128x32xf32, #tpu.memory_space<vmem>>, %arg2: memref<32x384xf32, #tpu.memory_space<vmem>>, %arg3: memref<1x384xf32, #tpu.memory_space<vmem>>, %arg4: memref<1x384xf32, #tpu.memory_space<vmem>>, %arg5: memref<1xf32, #tpu.memory_space<smem>>, %arg6: memref<1x128xf32, #tpu.memory_space<vmem>>) attributes {dimension_semantics = [#tpu.dimension_semantics<parallel>], iteration_bounds = array<i64: 1>, scalar_prefetch = 0 : i64, scratch_operands = 0 : i64, tpu.core_type = #tpu.core_type<tc>, window_params = [{transform_indices = @transform_0, window_bounds = array<i64: 128, 32>}, {pipeline_mode = #tpu.pipeline_mode<synchronous>, transform_indices = @transform_1, window_bounds = array<i64: 32, 384>}, {pipeline_mode = #tpu.pipeline_mode<synchronous>, transform_indices = @transform_2, window_bounds = array<i64: 1, 384>}, {pipeline_mode = #tpu.pipeline_mode<synchronous>, transform_indices = @transform_3, window_bounds = array<i64: 1, 384>}, {transform_indices = @transform_4, window_bounds = array<i64: 1>}, {transform_indices = @transform_5, window_bounds = array<i64: 1, 128>}]} {
    %c0 = arith.constant 0 : index
    %c0_0 = arith.constant 0 : index
    %0 = vector.load %arg1[%c0, %c0_0] : memref<128x32xf32, #tpu.memory_space<vmem>>, vector<128x32xf32>
    %c0_1 = arith.constant 0 : index
    %c0_2 = arith.constant 0 : index
    %1 = vector.load %arg2[%c0_1, %c0_2] : memref<32x384xf32, #tpu.memory_space<vmem>>, vector<32x384xf32>
    %cst = arith.constant dense<0.000000e+00> : vector<128x384xf32>
    %2 = tpu.matmul %0, %1, %cst {dimension_numbers = #tpu.dot_dimension_numbers<[1], [0], [0], [1], [0, 0, 1, 1], [], []>} : vector<128x32xf32>, vector<32x384xf32>, vector<128x384xf32> -> vector<128x384xf32>
    %c0_3 = arith.constant 0 : index
    %c0_4 = arith.constant 0 : index
    %3 = vector.load %arg3[%c0_3, %c0_4] : memref<1x384xf32, #tpu.memory_space<vmem>>, vector<1x384xf32>
    %4 = vector.broadcast %3 : vector<1x384xf32> to vector<128x384xf32>
    %5 = arith.addf %2, %4 : vector<128x384xf32>
    %cst_5 = arith.constant 0.000000e+00 : f32
    %6 = vector.broadcast %cst_5 : f32 to vector<128x384xf32>
    %7 = arith.maximumf %5, %6 : vector<128x384xf32>
    %c0_6 = arith.constant 0 : index
    %c0_7 = arith.constant 0 : index
    %8 = vector.load %arg4[%c0_6, %c0_7] : memref<1x384xf32, #tpu.memory_space<vmem>>, vector<1x384xf32>
    %9 = tpu.transpose %7, [1, 0] : vector<128x384xf32> -> vector<384x128xf32>
    %cst_8 = arith.constant dense<0.000000e+00> : vector<1x128xf32>
    %10 = tpu.matmul %8, %9, %cst_8 {dimension_numbers = #tpu.dot_dimension_numbers<[1], [0], [0], [1], [0, 0, 1, 1], [], []>} : vector<1x384xf32>, vector<384x128xf32>, vector<1x128xf32> -> vector<1x128xf32>
    %c0_9 = arith.constant 0 : index
    %11 = memref.load %arg5[%c0_9] : memref<1xf32, #tpu.memory_space<smem>>
    %12 = vector.broadcast %11 : f32 to vector<1x128xf32>
    %13 = arith.addf %10, %12 : vector<1x128xf32>
    %14 = arith.negf %13 : vector<1x128xf32>
    %15 = math.exp %14 : vector<1x128xf32>
    %cst_10 = arith.constant 1.000000e+00 : f32
    %16 = vector.broadcast %cst_10 : f32 to vector<1x128xf32>
    %17 = arith.addf %16, %15 : vector<1x128xf32>
    %18 = arith.divf %16, %17 : vector<1x128xf32>
    %c0_11 = arith.constant 0 : index
    %c0_12 = arith.constant 0 : index
    %19 = vector.load %arg6[%c0_11, %c0_12] : memref<1x128xf32, #tpu.memory_space<vmem>>, vector<1x128xf32>
    tpu.vector_store %arg6[%c0_11, %c0_12], %18 {strides = array<i32>} : memref<1x128xf32, #tpu.memory_space<vmem>>, vector<1x128xf32>,
    return
  }
  func.func @transform_0(%arg0: i32) -> (i32, i32) {
    %c0_i32 = arith.constant 0 : i32
    %c0_i32_0 = arith.constant 0 : i32
    return %arg0, %c0_i32 : i32, i32
  }
  func.func @transform_1(%arg0: i32) -> (i32, i32) {
    %c0_i32 = arith.constant 0 : i32
    %c0_i32_0 = arith.constant 0 : i32
    %c0_i32_1 = arith.constant 0 : i32
    return %c0_i32, %c0_i32_0 : i32, i32
  }
  func.func @transform_2(%arg0: i32) -> (i32, i32) {
    %c0_i32 = arith.constant 0 : i32
    %c0_i32_0 = arith.constant 0 : i32
    %c0_i32_1 = arith.constant 0 : i32
    return %c0_i32, %c0_i32_0 : i32, i32
  }
  func.func @transform_3(%arg0: i32) -> (i32, i32) {
    %c0_i32 = arith.constant 0 : i32
    %c0_i32_0 = arith.constant 0 : i32
    %c0_i32_1 = arith.constant 0 : i32
    return %c0_i32, %c0_i32_0 : i32, i32
  }
  func.func @transform_4(%arg0: i32) -> i32 {
    %c0_i32 = arith.constant 0 : i32
    %c0_i32_0 = arith.constant 0 : i32
    return %c0_i32 : i32
  }
  func.func @transform_5(%arg0: i32) -> (i32, i32) {
    %c0_i32 = arith.constant 0 : i32
    %c0_i32_0 = arith.constant 0 : i32
    return %c0_i32, %arg0 : i32, i32
  }
}

</mosaic_0001>

<llo_original>
// kernel: tpu_custom_call.1
$region0: #{tpu_custom_call.1}
  #allocation0 [shape = 'u32[]', space=smem, size = 0x4, offset = 0x4, fixed_abs, tag = 'smem constant byte address 0x4 - core index']
  #allocation1 [shape = 'u32[144,128]{1,0:T(1,128)}', space=vmem, size = 0x12000, scoped, tag = 'internal scratch']
  #allocation2 [shape = 'f32[1]{0:T(128)S(6)}', space=smem, size = 0x200, scoped, tag = 'scoped memory for tpu_custom_call.1']
  %s0 = inlined_call_operand.vmem [shape: f32[128,32], index: 0, kind: input, shape index: {}]
  %s1 = inlined_call_operand.vmem [shape: f32[32,384], index: 1, kind: input, shape index: {}]
  %s2 = inlined_call_operand.vmem [shape: f32[1,384], index: 2, kind: input, shape index: {}]
  %s3 = inlined_call_operand.vmem [shape: f32[1,384], index: 3, kind: input, shape index: {}]
  %s4 = inlined_call_operand.<no memory space> [shape: f32[1], index: 4, kind: input, shape index: {}]
  %s5 = inlined_call_operand.hbm [shape: f32[1,128], index: 5, kind: output, shape index: {}]
  %s6 = sld [smem:[#allocation0]]
  $region30: #{tpu_custom_call.1} parent=0
    _
  %s8 = ssub.s32 1, %s6
  %s9 = scalar_select 0, %s8, %s6
  %10 = sst [smem:[#allocation2]] %s4
  $region1: #{tpu_custom_call.1} parent=0
    #allocation3 [shape = 'u8[512]{0}', space=vmem, size = 0x400, scoped, tag = 'output window, operand 0, single buffered']
    #allocation4 [shape = 's32[1]{0}', space=sflag, size = 0x4, scoped, tag = 'scoped memory for tpu_custom_call.1']
    %11 = vsyncpa [#allocation4], 0
    // Predicated region
    $region2: #{tpu_custom_call.1} parent=1 // pred_check
      _
    $region3: #{tpu_custom_call.1} parent=1 // pred_check_branch
      %13 = sbr.rel (0) target = $region5
    $region4: #{tpu_custom_call.1} parent=1 // pred_region
      _
    $region5: #{tpu_custom_call.1} parent=1 // pred_fallthru
      _
    // Predicated region
    $region6: #{tpu_custom_call.1} parent=1 // pred_check
      _
    $region7: #{tpu_custom_call.1} parent=1 // pred_check_branch
      %15 = sbr.rel (0) target = $region9
    $region8: #{tpu_custom_call.1} parent=1 // pred_region
      _
    $region9: #{tpu_custom_call.1} parent=1 // pred_fallthru
      _
    // Predicated region
    $region10: #{tpu_custom_call.1} parent=1 // pred_check
      _
    $region11: #{tpu_custom_call.1} parent=1 // pred_check_branch
      %17 = sbr.rel (0) target = $region13
    $region12: #{tpu_custom_call.1} parent=1 // pred_region
      _
    $region13: #{tpu_custom_call.1} parent=1 // pred_fallthru
      _
    // Predicated region
    $region14: #{tpu_custom_call.1} parent=1 // pred_check
      _
    $region15: #{tpu_custom_call.1} parent=1 // pred_check_branch
      %19 = sbr.rel (0) target = $region17
    $region16: #{tpu_custom_call.1} parent=1 // pred_region
      _
    $region17: #{tpu_custom_call.1} parent=1 // pred_fallthru
      _
    // Predicated region
    $region18: #{tpu_custom_call.1} parent=1 // pred_check
      _
    $region19: #{tpu_custom_call.1} parent=1 // pred_check_branch
      %21 = sbr.rel (0) target = $region21
    $region20: #{tpu_custom_call.1} parent=1 // pred_region
      _
    $region21: #{tpu_custom_call.1} parent=1 // pred_fallthru
      _
    %v22 = vld [vmem:[%s0] sm:$0xff]
    %v23 = vld [vmem:[%s0 + $0x8] sm:$0xff]
    %v24 = vld [vmem:[%s0 + $0x10] sm:$0xff]
    %v25 = vld [vmem:[%s0 + $0x18] sm:$0xff]
    %v26 = vld [vmem:[%s0 + $0x20] sm:$0xff]
    %v27 = vld [vmem:[%s0 + $0x28] sm:$0xff]
    %v28 = vld [vmem:[%s0 + $0x30] sm:$0xff]
    %v29 = vld [vmem:[%s0 + $0x38] sm:$0xff]
    %v30 = vld [vmem:[%s0 + $0x40] sm:$0xff]
    %v31 = vld [vmem:[%s0 + $0x48] sm:$0xff]
    %v32 = vld [vmem:[%s0 + $0x50] sm:$0xff]
    %v33 = vld [vmem:[%s0 + $0x58] sm:$0xff]
    %v34 = vld [vmem:[%s0 + $0x60] sm:$0xff]
    %v35 = vld [vmem:[%s0 + $0x68] sm:$0xff]
    %v36 = vld [vmem:[%s0 + $0x70] sm:$0xff]
    %v37 = vld [vmem:[%s0 + $0x78] sm:$0xff]
    %v38 = vld [vmem:[%s1] sm:$0xff]
    %v39 = vld [vmem:[%s1 + $0x8] sm:$0xff]
    %v40 = vld [vmem:[%s1 + $0x10] sm:$0xff]
    %v41 = vld [vmem:[%s1 + $0x18] sm:$0xff]
    %v42 = vld [vmem:[%s1 + $0x20] sm:$0xff]
    %v43 = vld [vmem:[%s1 + $0x28] sm:$0xff]
    %v44 = vld [vmem:[%s1 + $0x30] sm:$0xff]
    %v45 = vld [vmem:[%s1 + $0x38] sm:$0xff]
    %v46 = vld [vmem:[%s1 + $0x40] sm:$0xff]
    %v47 = vld [vmem:[%s1 + $0x48] sm:$0xff]
    %v48 = vld [vmem:[%s1 + $0x50] sm:$0xff]
    %v49 = vld [vmem:[%s1 + $0x58] sm:$0xff]
    %v50 = vld [vmem:[%s2] sm:$0x7]
    %v52 = vlaneseq
    %v53 = vshrl.u32 %v52, 7
    %v54 = vsub.s32 0, %v53
    %v55 = vrot.slane %v50, %v54
    %v56 = vlaneseq
    %v57 = vshrl.u32 %v56, 7
    %v58 = vsub.s32 1, %v57
    %v59 = vrot.slane %v50, %v58
    %v60 = vlaneseq
    %v61 = vshrl.u32 %v60, 7
    %v62 = vsub.s32 2, %v61
    %v63 = vrot.slane %v50, %v62
    %vm67 = vcmask 261120
    %v69 = vsel %vm67, %v22, 0
    %v72 = vsel %vm67, %v23, 0
    %v75 = vsel %vm67, %v24, 0
    %v78 = vsel %vm67, %v25, 0
    %v81 = vsel %vm67, %v26, 0
    %v84 = vsel %vm67, %v27, 0
    %v87 = vsel %vm67, %v28, 0
    %v90 = vsel %vm67, %v29, 0
    %v93 = vsel %vm67, %v30, 0
    %v96 = vsel %vm67, %v31, 0
    %v99 = vsel %vm67, %v32, 0
    %v102 = vsel %vm67, %v33, 0
    %v105 = vsel %vm67, %v34, 0
    %v108 = vsel %vm67, %v35, 0
    %v111 = vsel %vm67, %v36, 0
    %v114 = vsel %vm67, %v37, 0
    %116 = vmatprep.subr.mxu0 %v39
    %117 = vmatpush1.msra.mxu0 %v38
    %118 = vmatprep.subr.mxu0 %v42
    %119 = vmatpush1.msra.mxu0 %v41
    %120 = vmatprep.subr.mxu0 %v45
    %121 = vmatpush1.msra.mxu0 %v44
    %122 = vmatprep.subr.mxu0 %v48
    %123 = vmatpush1.msra.mxu0 %v47
    %124 = vmatprep.subr.mxu0 0.0
    %125 = vmatpush1.msra.mxu0 0.0
    %126 = vmatprep.subr.mxu0 0.0
    %127 = vmatpush1.msra.mxu0 0.0
    %128 = vmatprep.subr.mxu0 0.0
    %129 = vmatpush1.msra.mxu0 0.0
    %130 = vmatprep.subr.mxu0 0.0
    %131 = vmatpush1.msra.mxu0 0.0
    %132 = vmatprep.subr.mxu0 0.0
    %133 = vmatpush1.msra.mxu0 0.0
    %134 = vmatprep.subr.mxu0 0.0
    %135 = vmatpush1.msra.mxu0 0.0
    %136 = vmatprep.subr.mxu0 0.0
    %137 = vmatpush1.msra.mxu0 0.0
    %138 = vmatprep.subr.mxu0 0.0
    %139 = vmatpush1.msra.mxu0 0.0
    %140 = vmatprep.subr.mxu0 0.0
    %141 = vmatpush1.msra.mxu0 0.0
    %142 = vmatprep.subr.mxu0 0.0
    %143 = vmatpush1.msra.mxu0 0.0
    %144 = vmatprep.subr.mxu0 0.0
    %145 = vmatpush1.msra.mxu0 0.0
    %146 = vmatprep.subr.mxu0 0.0
    %147 = vmatpush1.msra.mxu0 0.0
    %148 = vmatprep.subr.mxu0 0.0
    %149 = vmatpush1.msra.mxu0 0.0
    %150 = vmatprep.subr.mxu0 0.0
    %151 = vmatpush1.msra.mxu0 0.0
    %152 = vmatprep.subr.mxu0 0.0
    %153 = vmatpush1.msra.mxu0 0.0
    %154 = vmatprep.subr.mxu0 0.0
    %155 = vmatpush1.msra.mxu0 0.0
    %156 = vmatprep.subr.mxu0 0.0
    %157 = vmatpush1.msra.mxu0 0.0
    %158 = vmatprep.subr.mxu0 0.0
    %159 = vmatpush1.msra.mxu0 0.0
    %160 = vmatprep.subr.mxu0 0.0
    %161 = vmatpush1.msra.mxu0 0.0
    %162 = vmatprep.subr.mxu0 0.0
    %163 = vmatpush1.msra.mxu0 0.0
    %164 = vmatprep.subr.mxu0 0.0
    %165 = vmatpush1.msra.mxu0 0.0
    %166 = vmatprep.subr.mxu0 0.0
    %167 = vmatpush1.msra.mxu0 0.0
    %168 = vmatprep.subr.mxu0 0.0
    %169 = vmatpush1.msra.mxu0 0.0
    %170 = vmatprep.subr.mxu0 0.0
    %171 = vmatpush1.msra.mxu0 0.0
    %172 = vmatprep.subr.mxu0 0.0
    %173 = vmatpush1.msra.mxu0 0.0
    %174 = vmatprep.subr.mxu0 0.0
    %175 = vmatpush1.msra.mxu0 0.0
    %176 = vmatprep.subr.mxu0 0.0
    %177 = vmatpush1.msra.mxu0 0.0
    %178 = vmatprep.subr.mxu0 0.0
    %179 = vmatpush1.msra.mxu0 0.0
    %180 = vmatprep.mubr.f32.mxu0 0.0
    %181 = vmatmul.mubr.f32.gmra.mrb[0].mxu0 %v69
    %v182 = vpop.f32.mrb[0].mxu0
    %v183 = vadd.f32 %v55, %v182
    %v184 = vpop.f32.mrb[0].mxu0
    %v185 = vadd.f32 %v59, %v184
    %186 = vmatprep.mubr.f32.mxu0 0.0
    %187 = vmatmul.mubr.f32.gmra.mrb[0].mxu0 %v72
    %v188 = vpop.f32.mrb[0].mxu0
    %v189 = vadd.f32 %v55, %v188
    %v190 = vpop.f32.mrb[0].mxu0
    %v191 = vadd.f32 %v59, %v190
    %192 = vmatprep.mubr.f32.mxu0 0.0
    %193 = vmatmul.mubr.f32.gmra.mrb[0].mxu0 %v75
    %v194 = vpop.f32.mrb[0].mxu0
    %v195 = vadd.f32 %v55, %v194
    %v196 = vpop.f32.mrb[0].mxu0
    %v197 = vadd.f32 %v59, %v196
    %198 = vmatprep.mubr.f32.mxu0 0.0
    %199 = vmatmul.mubr.f32.gmra.mrb[0].mxu0 %v78
    %v200 = vpop.f32.mrb[0].mxu0
    %v201 = vadd.f32 %v55, %v200
    %v202 = vpop.f32.mrb[0].mxu0
    %v203 = vadd.f32 %v59, %v202
    %204 = vmatprep.mubr.f32.mxu0 0.0
    %205 = vmatmul.mubr.f32.gmra.mrb[0].mxu0 %v81
    %v206 = vpop.f32.mrb[0].mxu0
    %v207 = vadd.f32 %v55, %v206
    %v208 = vpop.f32.mrb[0].mxu0
    %v209 = vadd.f32 %v59, %v208
    %210 = vmatprep.mubr.f32.mxu0 0.0
    %211 = vmatmul.mubr.f32.gmra.mrb[0].mxu0 %v84
    %v212 = vpop.f32.mrb[0].mxu0
    %v213 = vadd.f32 %v55, %v212
    %v214 = vpop.f32.mrb[0].mxu0
    %v215 = vadd.f32 %v59, %v214
    %216 = vmatprep.mubr.f32.mxu0 0.0
    %217 = vmatmul.mubr.f32.gmra.mrb[0].mxu0 %v87
    %v218 = vpop.f32.mrb[0].mxu0
    %v219 = vadd.f32 %v55, %v218
    %v220 = vpop.f32.mrb[0].mxu0
    %v221 = vadd.f32 %v59, %v220
    %222 = vmatprep.mubr.f32.mxu0 0.0
    %223 = vmatmul.mubr.f32.gmra.mrb[0].mxu0 %v90
    %v224 = vpop.f32.mrb[0].mxu0
    %v225 = vadd.f32 %v55, %v224
    %v226 = vpop.f32.mrb[0].mxu0
    %v227 = vadd.f32 %v59, %v226
    %228 = vmatprep.mubr.f32.mxu0 0.0
    %229 = vmatmul.mubr.f32.gmra.mrb[0].mxu0 %v93
    %v230 = vpop.f32.mrb[0].mxu0
    %v231 = vadd.f32 %v55, %v230
    %v232 = vpop.f32.mrb[0].mxu0
    %v233 = vadd.f32 %v59, %v232
    %234 = vmatprep.mubr.f32.mxu0 0.0
    %235 = vmatmul.mubr.f32.gmra.mrb[0].mxu0 %v96
    %v236 = vpop.f32.mrb[0].mxu0
    %v237 = vadd.f32 %v55, %v236
    %v238 = vpop.f32.mrb[0].mxu0
    %v239 = vadd.f32 %v59, %v238
    %240 = vmatprep.mubr.f32.mxu0 0.0
    %241 = vmatmul.mubr.f32.gmra.mrb[0].mxu0 %v99
    %v242 = vpop.f32.mrb[0].mxu0
    %v243 = vadd.f32 %v55, %v242
    %v244 = vpop.f32.mrb[0].mxu0
    %v245 = vadd.f32 %v59, %v244
    %246 = vmatprep.mubr.f32.mxu0 0.0
    %247 = vmatmul.mubr.f32.gmra.mrb[0].mxu0 %v102
    %v248 = vpop.f32.mrb[0].mxu0
    %v249 = vadd.f32 %v55, %v248
    %v250 = vpop.f32.mrb[0].mxu0
    %v251 = vadd.f32 %v59, %v250
    %252 = vmatprep.mubr.f32.mxu0 0.0
    %253 = vmatmul.mubr.f32.gmra.mrb[0].mxu0 %v105
    %v254 = vpop.f32.mrb[0].mxu0
    %v255 = vadd.f32 %v55, %v254
    %v256 = vpop.f32.mrb[0].mxu0
    %v257 = vadd.f32 %v59, %v256
    %258 = vmatprep.mubr.f32.mxu0 0.0
    %259 = vmatmul.mubr.f32.gmra.mrb[0].mxu0 %v108
    %v260 = vpop.f32.mrb[0].mxu0
    %v261 = vadd.f32 %v55, %v260
    %v262 = vpop.f32.mrb[0].mxu0
    %v263 = vadd.f32 %v59, %v262
    %264 = vmatprep.mubr.f32.mxu0 0.0
    %265 = vmatmul.mubr.f32.gmra.mrb[0].mxu0 %v111
    %v266 = vpop.f32.mrb[0].mxu0
    %v267 = vadd.f32 %v55, %v266
    %v268 = vpop.f32.mrb[0].mxu0
    %v269 = vadd.f32 %v59, %v268
    %270 = vmatprep.mubr.f32.mxu0 0.0
    %271 = vmatmul.mubr.f32.gmra.mrb[0].mxu0 %v114
    %v272 = vpop.f32.mrb[0].mxu0
    %v273 = vadd.f32 %v55, %v272
    %v274 = vpop.f32.mrb[0].mxu0
    %v275 = vadd.f32 %v59, %v274
    %276 = vdwg.mxu0
    %277 = vmatprep.subr.mxu0 0.0
    %278 = vmatpush1.msra.mxu0 %v40
    %279 = vmatprep.subr.mxu0 0.0
    %280 = vmatpush1.msra.mxu0 %v43
    %281 = vmatprep.subr.mxu0 0.0
    %282 = vmatpush1.msra.mxu0 %v46
    %283 = vmatprep.subr.mxu0 0.0
    %284 = vmatpush1.msra.mxu0 %v49
    %285 = vmatprep.subr.mxu0 0.0
    %286 = vmatpush1.msra.mxu0 0.0
    %287 = vmatprep.subr.mxu0 0.0
    %288 = vmatpush1.msra.mxu0 0.0
    %289 = vmatprep.subr.mxu0 0.0
    %290 = vmatpush1.msra.mxu0 0.0
    %291 = vmatprep.subr.mxu0 0.0
    %292 = vmatpush1.msra.mxu0 0.0
    %293 = vmatprep.subr.mxu0 0.0
    %294 = vmatpush1.msra.mxu0 0.0
    %295 = vmatprep.subr.mxu0 0.0
    %296 = vmatpush1.msra.mxu0 0.0
    %297 = vmatprep.subr.mxu0 0.0
    %298 = vmatpush1.msra.mxu0 0.0
    %299 = vmatprep.subr.mxu0 0.0
    %300 = vmatpush1.msra.mxu0 0.0
    %301 = vmatprep.subr.mxu0 0.0
    %302 = vmatpush1.msra.mxu0 0.0
    %303 = vmatprep.subr.mxu0 0.0
    %304 = vmatpush1.msra.mxu0 0.0
    %305 = vmatprep.subr.mxu0 0.0
    %306 = vmatpush1.msra.mxu0 0.0
    %307 = vmatprep.subr.mxu0 0.0
    %308 = vmatpush1.msra.mxu0 0.0
    %309 = vmatprep.subr.mxu0 0.0
    %310 = vmatpush1.msra.mxu0 0.0
    %311 = vmatprep.subr.mxu0 0.0
    %312 = vmatpush1.msra.mxu0 0.0
    %313 = vmatprep.subr.mxu0 0.0
    %314 = vmatpush1.msra.mxu0 0.0
    %315 = vmatprep.subr.mxu0 0.0
    %316 = vmatpush1.msra.mxu0 0.0
    %317 = vmatprep.subr.mxu0 0.0
    %318 = vmatpush1.msra.mxu0 0.0
    %319 = vmatprep.subr.mxu0 0.0
    %320 = vmatpush1.msra.mxu0 0.0
    %321 = vmatprep.subr.mxu0 0.0
    %322 = vmatpush1.msra.mxu0 0.0
    %323 = vmatprep.subr.mxu0 0.0
    %324 = vmatpush1.msra.mxu0 0.0
    %325 = vmatprep.subr.mxu0 0.0
    %326 = vmatpush1.msra.mxu0 0.0
    %327 = vmatprep.subr.mxu0 0.0
    %328 = vmatpush1.msra.mxu0 0.0
    %329 = vmatprep.subr.mxu0 0.0
    %330 = vmatpush1.msra.mxu0 0.0
    %331 = vmatprep.subr.mxu0 0.0
    %332 = vmatpush1.msra.mxu0 0.0
    %333 = vmatprep.subr.mxu0 0.0
    %334 = vmatpush1.msra.mxu0 0.0
    %335 = vmatprep.subr.mxu0 0.0
    %336 = vmatpush1.msra.mxu0 0.0
    %337 = vmatprep.subr.mxu0 0.0
    %338 = vmatpush1.msra.mxu0 0.0
    %339 = vmatprep.subr.mxu0 0.0
    %340 = vmatpush1.msra.mxu0 0.0
    %341 = vmatprep.mubr.f32.mxu0 0.0
    %342 = vmatmul.mubr.f32.gmra.mrb[0].mxu0 %v69
    %v343 = vpop.f32.mrb[0].mxu0
    %v344 = vadd.f32 %v63, %v343
    %v345 = vpop.f32.mrb[0].mxu0
    %346 = vmatprep.mubr.f32.mxu0 0.0
    %347 = vmatmul.mubr.f32.gmra.mrb[0].mxu0 %v72
    %v348 = vpop.f32.mrb[0].mxu0
    %v349 = vadd.f32 %v63, %v348
    %v350 = vpop.f32.mrb[0].mxu0
    %351 = vmatprep.mubr.f32.mxu0 0.0
    %352 = vmatmul.mubr.f32.gmra.mrb[0].mxu0 %v75
    %v353 = vpop.f32.mrb[0].mxu0
    %v354 = vadd.f32 %v63, %v353
    %v355 = vpop.f32.mrb[0].mxu0
    %356 = vmatprep.mubr.f32.mxu0 0.0
    %357 = vmatmul.mubr.f32.gmra.mrb[0].mxu0 %v78
    %v358 = vpop.f32.mrb[0].mxu0
    %v359 = vadd.f32 %v63, %v358
    %v360 = vpop.f32.mrb[0].mxu0
    %361 = vmatprep.mubr.f32.mxu0 0.0
    %362 = vmatmul.mubr.f32.gmra.mrb[0].mxu0 %v81
    %v363 = vpop.f32.mrb[0].mxu0
    %v364 = vadd.f32 %v63, %v363
    %v365 = vpop.f32.mrb[0].mxu0
    %366 = vmatprep.mubr.f32.mxu0 0.0
    %367 = vmatmul.mubr.f32.gmra.mrb[0].mxu0 %v84
    %v368 = vpop.f32.mrb[0].mxu0
    %v369 = vadd.f32 %v63, %v368
    %v370 = vpop.f32.mrb[0].mxu0
    %371 = vmatprep.mubr.f32.mxu0 0.0
    %372 = vmatmul.mubr.f32.gmra.mrb[0].mxu0 %v87
    %v373 = vpop.f32.mrb[0].mxu0
    %v374 = vadd.f32 %v63, %v373
    %v375 = vpop.f32.mrb[0].mxu0
    %376 = vmatprep.mubr.f32.mxu0 0.0
    %377 = vmatmul.mubr.f32.gmra.mrb[0].mxu0 %v90
    %v378 = vpop.f32.mrb[0].mxu0
    %v379 = vadd.f32 %v63, %v378
    %v380 = vpop.f32.mrb[0].mxu0
    %381 = vmatprep.mubr.f32.mxu0 0.0
    %382 = vmatmul.mubr.f32.gmra.mrb[0].mxu0 %v93
    %v383 = vpop.f32.mrb[0].mxu0
    %v384 = vadd.f32 %v63, %v383
    %v385 = vpop.f32.mrb[0].mxu0
    %386 = vmatprep.mubr.f32.mxu0 0.0
    %387 = vmatmul.mubr.f32.gmra.mrb[0].mxu0 %v96
    %v388 = vpop.f32.mrb[0].mxu0
    %v389 = vadd.f32 %v63, %v388
    %v390 = vpop.f32.mrb[0].mxu0
    %391 = vmatprep.mubr.f32.mxu0 0.0
    %392 = vmatmul.mubr.f32.gmra.mrb[0].mxu0 %v99
    %v393 = vpop.f32.mrb[0].mxu0
    %v394 = vadd.f32 %v63, %v393
    %v395 = vpop.f32.mrb[0].mxu0
    %396 = vmatprep.mubr.f32.mxu0 0.0
    %397 = vmatmul.mubr.f32.gmra.mrb[0].mxu0 %v102
    %v398 = vpop.f32.mrb[0].mxu0
    %v399 = vadd.f32 %v63, %v398
    %v400 = vpop.f32.mrb[0].mxu0
    %401 = vmatprep.mubr.f32.mxu0 0.0
    %402 = vmatmul.mubr.f32.gmra.mrb[0].mxu0 %v105
    %v403 = vpop.f32.mrb[0].mxu0
    %v404 = vadd.f32 %v63, %v403
    %v405 = vpop.f32.mrb[0].mxu0
    %406 = vmatprep.mubr.f32.mxu0 0.0
    %407 = vmatmul.mubr.f32.gmra.mrb[0].mxu0 %v108
    %v408 = vpop.f32.mrb[0].mxu0
    %v409 = vadd.f32 %v63, %v408
    %v410 = vpop.f32.mrb[0].mxu0
    %411 = vmatprep.mubr.f32.mxu0 0.0
    %412 = vmatmul.mubr.f32.gmra.mrb[0].mxu0 %v111
    %v413 = vpop.f32.mrb[0].mxu0
    %v414 = vadd.f32 %v63, %v413
    %v415 = vpop.f32.mrb[0].mxu0
    %416 = vmatprep.mubr.f32.mxu0 0.0
    %417 = vmatmul.mubr.f32.gmra.mrb[0].mxu0 %v114
    %v418 = vpop.f32.mrb[0].mxu0
    %v419 = vadd.f32 %v63, %v418
    %v420 = vpop.f32.mrb[0].mxu0
    %421 = vdwg.mxu0
    %v422 = vmax.f32 %v183, 0.0
    %v423 = vmax.f32 %v185, 0.0
    %v424 = vmax.f32 %v344, 0.0
    %v425 = vmax.f32 %v189, 0.0
    %v426 = vmax.f32 %v191, 0.0
    %v427 = vmax.f32 %v349, 0.0
    %v428 = vmax.f32 %v195, 0.0
    %v429 = vmax.f32 %v197, 0.0
    %v430 = vmax.f32 %v354, 0.0
    %v431 = vmax.f32 %v201, 0.0
    %v432 = vmax.f32 %v203, 0.0
    %v433 = vmax.f32 %v359, 0.0
    %v434 = vmax.f32 %v207, 0.0
    %v435 = vmax.f32 %v209, 0.0
    %v436 = vmax.f32 %v364, 0.0
    %v437 = vmax.f32 %v213, 0.0
    %v438 = vmax.f32 %v215, 0.0
    %v439 = vmax.f32 %v369, 0.0
    %v440 = vmax.f32 %v219, 0.0
    %v441 = vmax.f32 %v221, 0.0
    %v442 = vmax.f32 %v374, 0.0
    %v443 = vmax.f32 %v225, 0.0
    %v444 = vmax.f32 %v227, 0.0
    %v445 = vmax.f32 %v379, 0.0
    %v446 = vmax.f32 %v231, 0.0
    %v447 = vmax.f32 %v233, 0.0
    %v448 = vmax.f32 %v384, 0.0
    %v449 = vmax.f32 %v237, 0.0
    %v450 = vmax.f32 %v239, 0.0
    %v451 = vmax.f32 %v389, 0.0
    %v452 = vmax.f32 %v243, 0.0
    %v453 = vmax.f32 %v245, 0.0
    %v454 = vmax.f32 %v394, 0.0
    %v455 = vmax.f32 %v249, 0.0
    %v456 = vmax.f32 %v251, 0.0
    %v457 = vmax.f32 %v399, 0.0
    %v458 = vmax.f32 %v255, 0.0
    %v459 = vmax.f32 %v257, 0.0
    %v460 = vmax.f32 %v404, 0.0
    %v461 = vmax.f32 %v261, 0.0
    %v462 = vmax.f32 %v263, 0.0
    %v463 = vmax.f32 %v409, 0.0
    %v464 = vmax.f32 %v267, 0.0
    %v465 = vmax.f32 %v269, 0.0
    %v466 = vmax.f32 %v414, 0.0
    %v467 = vmax.f32 %v273, 0.0
    %v468 = vmax.f32 %v275, 0.0
    %v469 = vmax.f32 %v419, 0.0
    %v470 = vld [vmem:[%s3] sm:$0x7]
    %s471 = sld [smem:[#allocation2]]
    %v472 = vstv %s471
    %v474 = vlaneseq
    %v475 = vshrl.u32 %v474, 7
    %v476 = vsub.s32 0, %v475
    %v477 = vrot.slane %v470, %v476
    %v478 = vlaneseq
    %v479 = vshrl.u32 %v478, 7
    %v480 = vsub.s32 1, %v479
    %v481 = vrot.slane %v470, %v480
    %v482 = vlaneseq
    %v483 = vshrl.u32 %v482, 7
    %v484 = vsub.s32 2, %v483
    %v485 = vrot.slane %v470, %v484
    %489 = vmatprep.subr.mxu0 %v423
    %490 = vmatpush1.xpose.msra.mxu0 %v422
    %491 = vmatprep.subr.mxu0 %v426
    %492 = vmatpush1.xpose.msra.mxu0 %v425
    %493 = vmatprep.subr.mxu0 %v429
    %494 = vmatpush1.xpose.msra.mxu0 %v428
    %495 = vmatprep.subr.mxu0 %v432
    %496 = vmatpush1.xpose.msra.mxu0 %v431
    %497 = vmatprep.subr.mxu0 %v435
    %498 = vmatpush1.xpose.msra.mxu0 %v434
    %499 = vmatprep.subr.mxu0 %v438
    %500 = vmatpush1.xpose.msra.mxu0 %v437
    %501 = vmatprep.subr.mxu0 %v441
    %502 = vmatpush1.xpose.msra.mxu0 %v440
    %503 = vmatprep.subr.mxu0 %v444
    %504 = vmatpush1.xpose.msra.mxu0 %v443
    %505 = vmatprep.subr.mxu0 %v447
    %506 = vmatpush1.xpose.msra.mxu0 %v446
    %507 = vmatprep.subr.mxu0 %v450
    %508 = vmatpush1.xpose.msra.mxu0 %v449
    %509 = vmatprep.subr.mxu0 %v453
    %510 = vmatpush1.xpose.msra.mxu0 %v452
    %511 = vmatprep.subr.mxu0 %v456
    %512 = vmatpush1.xpose.msra.mxu0 %v455
    %513 = vmatprep.subr.mxu0 %v459
    %514 = vmatpush1.xpose.msra.mxu0 %v458
    %515 = vmatprep.subr.mxu0 %v462
    %516 = vmatpush1.xpose.msra.mxu0 %v461
    %517 = vmatprep.subr.mxu0 %v465
    %518 = vmatpush1.xpose.msra.mxu0 %v464
    %519 = vmatprep.subr.mxu0 %v468
    %520 = vmatpush1.xpose.msra.mxu0 %v467
    %521 = vmatprep.subr.mxu0 0.0
    %522 = vmatpush1.xpose.msra.mxu0 0.0
    %523 = vmatprep.subr.mxu0 0.0
    %524 = vmatpush1.xpose.msra.mxu0 0.0
    %525 = vmatprep.subr.mxu0 0.0
    %526 = vmatpush1.xpose.msra.mxu0 0.0
    %527 = vmatprep.subr.mxu0 0.0
    %528 = vmatpush1.xpose.msra.mxu0 0.0
    %529 = vmatprep.subr.mxu0 0.0
    %530 = vmatpush1.xpose.msra.mxu0 0.0
    %531 = vmatprep.subr.mxu0 0.0
    %532 = vmatpush1.xpose.msra.mxu0 0.0
    %533 = vmatprep.subr.mxu0 0.0
    %534 = vmatpush1.xpose.msra.mxu0 0.0
    %535 = vmatprep.subr.mxu0 0.0
    %536 = vmatpush1.xpose.msra.mxu0 0.0
    %537 = vmatprep.subr.mxu0 0.0
    %538 = vmatpush1.xpose.msra.mxu0 0.0
    %539 = vmatprep.subr.mxu0 0.0
    %540 = vmatpush1.xpose.msra.mxu0 0.0
    %541 = vmatprep.subr.mxu0 0.0
    %542 = vmatpush1.xpose.msra.mxu0 0.0
    %543 = vmatprep.subr.mxu0 0.0
    %544 = vmatpush1.xpose.msra.mxu0 0.0
    %545 = vmatprep.subr.mxu0 0.0
    %546 = vmatpush1.xpose.msra.mxu0 0.0
    %547 = vmatprep.subr.mxu0 0.0
    %548 = vmatpush1.xpose.msra.mxu0 0.0
    %549 = vmatprep.subr.mxu0 0.0
    %550 = vmatpush1.xpose.msra.mxu0 0.0
    %551 = vmatprep.subr.mxu0 0.0
    %552 = vmatpush1.xpose.msra.mxu0 0.0
    %553 = vmatprep.mubr.f32.mxu0 %v481
    %554 = vmatmul.mubr.f32.gmra.mrb[0].mxu0 %v477
    %v555 = vpop.f32.mrb[0].mxu0
    %v556 = vadd.f32 %v472, %v555
    %v557 = vpop.f32.mrb[0].mxu0
    %558 = vdwg.mxu0
    %559 = vmatprep.subr.mxu0 0.0
    %560 = vmatpush1.xpose.msra.mxu0 %v424
    %561 = vmatprep.subr.mxu0 0.0
    %562 = vmatpush1.xpose.msra.mxu0 %v427
    %563 = vmatprep.subr.mxu0 0.0
    %564 = vmatpush1.xpose.msra.mxu0 %v430
    %565 = vmatprep.subr.mxu0 0.0
    %566 = vmatpush1.xpose.msra.mxu0 %v433
    %567 = vmatprep.subr.mxu0 0.0
    %568 = vmatpush1.xpose.msra.mxu0 %v436
    %569 = vmatprep.subr.mxu0 0.0
    %570 = vmatpush1.xpose.msra.mxu0 %v439
    %571 = vmatprep.subr.mxu0 0.0
    %572 = vmatpush1.xpose.msra.mxu0 %v442
    %573 = vmatprep.subr.mxu0 0.0
    %574 = vmatpush1.xpose.msra.mxu0 %v445
    %575 = vmatprep.subr.mxu0 0.0
    %576 = vmatpush1.xpose.msra.mxu0 %v448
    %577 = vmatprep.subr.mxu0 0.0
    %578 = vmatpush1.xpose.msra.mxu0 %v451
    %579 = vmatprep.subr.mxu0 0.0
    %580 = vmatpush1.xpose.msra.mxu0 %v454
    %581 = vmatprep.subr.mxu0 0.0
    %582 = vmatpush1.xpose.msra.mxu0 %v457
    %583 = vmatprep.subr.mxu0 0.0
    %584 = vmatpush1.xpose.msra.mxu0 %v460
    %585 = vmatprep.subr.mxu0 0.0
    %586 = vmatpush1.xpose.msra.mxu0 %v463
    %587 = vmatprep.subr.mxu0 0.0
    %588 = vmatpush1.xpose.msra.mxu0 %v466
    %589 = vmatprep.subr.mxu0 0.0
    %590 = vmatpush1.xpose.msra.mxu0 %v469
    %591 = vmatprep.subr.mxu0 0.0
    %592 = vmatpush1.xpose.msra.mxu0 0.0
    %593 = vmatprep.subr.mxu0 0.0
    %594 = vmatpush1.xpose.msra.mxu0 0.0
    %595 = vmatprep.subr.mxu0 0.0
    %596 = vmatpush1.xpose.msra.mxu0 0.0
    %597 = vmatprep.subr.mxu0 0.0
    %598 = vmatpush1.xpose.msra.mxu0 0.0
    %599 = vmatprep.subr.mxu0 0.0
    %600 = vmatpush1.xpose.msra.mxu0 0.0
    %601 = vmatprep.subr.mxu0 0.0
    %602 = vmatpush1.xpose.msra.mxu0 0.0
    %603 = vmatprep.subr.mxu0 0.0
    %604 = vmatpush1.xpose.msra.mxu0 0.0
    %605 = vmatprep.subr.mxu0 0.0
    %606 = vmatpush1.xpose.msra.mxu0 0.0
    %607 = vmatprep.subr.mxu0 0.0
    %608 = vmatpush1.xpose.msra.mxu0 0.0
    %609 = vmatprep.subr.mxu0 0.0
    %610 = vmatpush1.xpose.msra.mxu0 0.0
    %611 = vmatprep.subr.mxu0 0.0
    %612 = vmatpush1.xpose.msra.mxu0 0.0
    %613 = vmatprep.subr.mxu0 0.0
    %614 = vmatpush1.xpose.msra.mxu0 0.0
    %615 = vmatprep.subr.mxu0 0.0
    %616 = vmatpush1.xpose.msra.mxu0 0.0
    %617 = vmatprep.subr.mxu0 0.0
    %618 = vmatpush1.xpose.msra.mxu0 0.0
    %619 = vmatprep.subr.mxu0 0.0
    %620 = vmatpush1.xpose.msra.mxu0 0.0
    %621 = vmatprep.subr.mxu0 0.0
    %622 = vmatpush1.xpose.msra.mxu0 0.0
    %623 = vmatprep.mubr.f32.mxu0 0.0
    %624 = vmatmul.mubr.f32.gmra.mrb[0].mxu0 %v485
    %v625 = vpop.f32.mrb[0].mxu0
    %v626 = vadd.f32 %v556, %v625
    %v627 = vpop.f32.mrb[0].mxu0
    %628 = vdwg.mxu0
    %v629 = vxor.u32 %v626, 2147483648
    %v630 = vmul.f32 %v629, 1.442695
    %v631 = vpow.pop %v630
    %v632 = vadd.f32 %v631, 1.0
    %v633 = vrcp.pop %v632
    %v634 = vmul.f32 1.0, %v633
    %635 = vst [vmem:[#allocation3] sm:$0x1] %v634
    // Predicated region
    $region22: #{tpu_custom_call.1} parent=1 // pred_check
      _
    $region23: #{tpu_custom_call.1} parent=1 // pred_check_branch
      %637 = sbr.rel (0) target = $region25
    $region24: #{tpu_custom_call.1} parent=1 // pred_region
      %s639 = ssub.s32 16, 16
      %640 = vsyncadd [#allocation4], %s639
      %s642 = sshll.u32 [#allocation3], 4
      %s643 = int_to_ptr.vmem [resolvable:$true] %s642
      %645 = dma.vmem_to_hbm [thread:$0]  %s643, 16, %s5, [#allocation4]
    $region25: #{tpu_custom_call.1} parent=1 // pred_fallthru
      _
    // Predicated region
    $region26: #{tpu_custom_call.1} parent=1 // pred_check
      _
    $region27: #{tpu_custom_call.1} parent=1 // pred_check_branch
      %647 = sbr.rel (0) target = $region29
    $region28: #{tpu_custom_call.1} parent=1 // pred_region
      %648 = dma.done [#allocation4], 16
    $region29: #{tpu_custom_call.1} parent=1 // pred_fallthru
      _
    %649 = vsyncpa [#allocation4], 1

</llo_original>
